<compile_context>
chip_gen: v7x
topology: tpu7x:2x2x1
jax: 0.10.0
libtpu: 0.0.40
codegen_flags: <defaults>
</compile_context>

<pallas_src>
import jax
import jax.numpy as jnp
from jax.experimental import pallas as pl
from jax.experimental.pallas import tpu as pltpu

HIDDEN = 64   # SB3 default net_arch [64, 64]


def _policy_kernel(obs_ref, eps_ref,
                   w1_ref, b1_ref, w2_ref, b2_ref, w3_ref, b3_ref, std_ref,
                   out_ref):
    """Fused tanh-MLP policy + diagonal-Gaussian sample for one batch tile.

    Per grid step (one TB-row batch slab):
      obs : (TB, feat)  concatenated observation (narrow; compiler masks K=feat)
      eps : (TB, A)     N(0,1) noise
      w1  : (feat, H)   b1 : (1, H)
      w2  : (H, H)      b2 : (1, H)
      w3  : (H, A)      b3 : (1, A)   std : (1, A) = exp(log_std), folded once
      out : (TB, A)     sampled actions
    """
    x = obs_ref[...]

    # MLP extractor (tanh x2) + action_net, f32 accumulation on the MXU.
    h1 = jnp.tanh(
        jnp.dot(x, w1_ref[...], preferred_element_type=jnp.float32) + b1_ref[...])
    h2 = jnp.tanh(
        jnp.dot(h1, w2_ref[...], preferred_element_type=jnp.float32) + b2_ref[...])
    mean = jnp.dot(h2, w3_ref[...], preferred_element_type=jnp.float32) + b3_ref[...]

    # deterministic=False -> sample N(mean, diag(std^2)).
    out_ref[...] = mean + std_ref[...] * eps_ref[...]


def _choose_batch_tile(B, tile_b):
    """Pick (tb, b_pad): tb multiple of 8, minimal row padding, and >=2 grid
    steps for mid/large batches so v7x's two TensorCores both get work."""
    n_steps = -(-B // tile_b)          # cdiv
    if B >= 16:
        n_steps = max(n_steps, 2)      # megacore: keep both TCs busy on v7x
    per = -(-B // n_steps)
    tb = max(8, ((per + 7) // 8) * 8)  # f32 sublane alignment
    b_pad = ((B + tb - 1) // tb) * tb
    return tb, b_pad


def onnxable_policy_forward(agent_position, agent_angle, enemy_position,
                            treasure_positions, params, eps, *, tile_b=2048):
    """CombinedExtractor + MLP policy + Gaussian sampling in one pallas_call."""
    B = agent_position.shape[0]
    A = eps.shape[1]
    w1, b1, w2, b2, w3, b3, std = params
    feat, H = w1.shape
    assert w3.shape == (H, A), (w3.shape, H, A)
    assert std.shape == (1, A), (std.shape, A)

    # CombinedExtractor: flatten + concat once in XLA (tiny (B, feat) array,
    # negligible HBM intermediate; saves 3 of 4 input DMA streams in the kernel).
    obs = jnp.concatenate(
        [agent_position.reshape(B, -1).astype(jnp.float32),
         agent_angle.reshape(B, -1).astype(jnp.float32),
         enemy_position.reshape(B, -1).astype(jnp.float32),
         treasure_positions.reshape(B, -1).astype(jnp.float32)], axis=-1)
    assert obs.shape[1] == feat, (obs.shape, feat)

    tb, b_pad = _choose_batch_tile(B, tile_b)
    obs_p = jnp.pad(obs, ((0, b_pad - B), (0, 0)))
    eps_p = jnp.pad(eps.astype(jnp.float32), ((0, b_pad - B), (0, 0)))

    def tiled(cols):                    # batch-tiled operands (narrow last dim OK:
        return pl.BlockSpec((tb, cols), lambda i: (i, 0))   # block == full dim)

    def resident(shape):                # same block every step -> VMEM-resident
        return pl.BlockSpec(shape, lambda i: (0, 0))

    out = pl.pallas_call(
        _policy_kernel,
        out_shape=jax.ShapeDtypeStruct((b_pad, A), jnp.float32),
        grid=(b_pad // tb,),
        in_specs=[
            tiled(feat),                 # concatenated observation
            tiled(A),                    # eps (narrow)
            resident((feat, H)), resident((1, H)),
            resident((H, H)),    resident((1, H)),
            resident((H, A)),    resident((1, A)),
            resident((1, A)),            # std
        ],
        out_specs=pl.BlockSpec((tb, A), lambda i: (i, 0)),   # narrow output
        compiler_params=pltpu.CompilerParams(
            dimension_semantics=("parallel",)),   # megacore on v7x; no-op v5e/v6e
    )(obs_p, eps_p, w1, b1, w2, b2, w3, b3, std)

    return out[:B, :]


def init_params(key, feat_dim, hidden_dim, action_dim):
    """Deterministic synthetic SB3-style parameters (no checkpoint load)."""
    # TODO(synk): real deployments would load trained SB3 weights here.
    k1, k2, k3 = jax.random.split(key, 3)
    w1 = (jax.random.normal(k1, (feat_dim, hidden_dim), jnp.float32)
          / jnp.sqrt(jnp.float32(feat_dim)))
    b1 = jnp.zeros((1, hidden_dim), jnp.float32)
    w2 = (jax.random.normal(k2, (hidden_dim, hidden_dim), jnp.float32)
          / jnp.sqrt(jnp.float32(hidden_dim)))
    b2 = jnp.zeros((1, hidden_dim), jnp.float32)
    w3 = (jax.random.normal(k3, (hidden_dim, action_dim), jnp.float32)
          / jnp.sqrt(jnp.float32(hidden_dim)))
    b3 = jnp.zeros((1, action_dim), jnp.float32)
    log_std = jnp.zeros((1, action_dim), jnp.float32)   # SB3 init: log_std = 0
    return (w1, b1, w2, b2, w3, b3, log_std)


def prepare_params(raw_params):
    """Fold exp(log_std) once (not per call); weights stay unpadded."""
    w1, b1, w2, b2, w3, b3, log_std = raw_params
    return (w1, b1, w2, b2, w3, b3, jnp.exp(log_std))


def _reference_forward(agent_position, agent_angle, enemy_position,
                       treasure_positions, raw_params, eps):
    """Pure-JAX reference of the SB3 forward (for correctness check only)."""
    w1, b1, w2, b2, w3, b3, log_std = raw_params
    B = agent_position.shape[0]
    obs = jnp.concatenate(
        [agent_position.reshape(B, -1), agent_angle.reshape(B, -1),
         enemy_position.reshape(B, -1), treasure_positions.reshape(B, -1)],
        axis=-1).astype(jnp.float32)
    h1 = jnp.tanh(obs @ w1 + b1)
    h2 = jnp.tanh(h1 @ w2 + b2)
    mean = h2 @ w3 + b3
    return mean + jnp.exp(log_std) * eps


if __name__ == "__main__":
    key = jax.random.PRNGKey(0)
    k_obs, k_param, k_eps = jax.random.split(key, 3)

    B = 2            # batch
    T = 3            # number of treasures
    ACTION_DIM = 2   # continuous action (e.g. dx, dy)

    ka, kb, kc, kd = jax.random.split(k_obs, 4)
    agent_position = jax.random.uniform(ka, (B, 2), jnp.float32)
    agent_angle = jax.random.uniform(kb, (B, 1), jnp.float32)
    enemy_position = jax.random.uniform(kc, (B, 2), jnp.float32)
    treasure_positions = jax.random.uniform(kd, (B, T, 2), jnp.float32)

    feat_dim = 2 + 1 + 2 + 2 * T   # 11
    raw_params = init_params(k_param, feat_dim, HIDDEN, ACTION_DIM)
    params = prepare_params(raw_params)

    # deterministic=False -> Gaussian noise (fixed seed so the run is reproducible)
    eps = jax.random.normal(k_eps, (B, ACTION_DIM), jnp.float32)

    actions = onnxable_policy_forward(
        agent_position, agent_angle, enemy_position, treasure_positions,
        params, eps)
    actions = jax.block_until_ready(actions)

    ref = _reference_forward(agent_position, agent_angle, enemy_position,
                             treasure_positions, raw_params, eps)

    assert actions.shape == (B, ACTION_DIM)
    assert jnp.all(jnp.isfinite(actions))
    assert jnp.allclose(actions, ref, atol=1e-5, rtol=1e-5), (
        float(jnp.max(jnp.abs(actions - ref))))
    print("KERNEL_OK")
</pallas_src>

<mosaic_0001>
module attributes {stable_mosaic.version = 11 : i64} {
  func.func @_policy_kernel(%arg0: i32, %arg1: memref<8x11xf32, #tpu.memory_space<vmem>>, %arg2: memref<8x2xf32, #tpu.memory_space<vmem>>, %arg3: memref<11x64xf32, #tpu.memory_space<vmem>>, %arg4: memref<1x64xf32, #tpu.memory_space<vmem>>, %arg5: memref<64x64xf32, #tpu.memory_space<vmem>>, %arg6: memref<1x64xf32, #tpu.memory_space<vmem>>, %arg7: memref<64x2xf32, #tpu.memory_space<vmem>>, %arg8: memref<1x2xf32, #tpu.memory_space<vmem>>, %arg9: memref<1x2xf32, #tpu.memory_space<vmem>>, %arg10: memref<8x2xf32, #tpu.memory_space<vmem>>) attributes {dimension_semantics = [#tpu.dimension_semantics<parallel>], iteration_bounds = array<i64: 1>, scalar_prefetch = 0 : i64, scratch_operands = 0 : i64, tpu.core_type = #tpu.core_type<tc>, window_params = [{transform_indices = @transform_0, window_bounds = array<i64: 8, 11>}, {transform_indices = @transform_1, window_bounds = array<i64: 8, 2>}, {pipeline_mode = #tpu.pipeline_mode<synchronous>, transform_indices = @transform_2, window_bounds = array<i64: 11, 64>}, {pipeline_mode = #tpu.pipeline_mode<synchronous>, transform_indices = @transform_3, window_bounds = array<i64: 1, 64>}, {pipeline_mode = #tpu.pipeline_mode<synchronous>, transform_indices = @transform_4, window_bounds = array<i64: 64, 64>}, {pipeline_mode = #tpu.pipeline_mode<synchronous>, transform_indices = @transform_5, window_bounds = array<i64: 1, 64>}, {pipeline_mode = #tpu.pipeline_mode<synchronous>, transform_indices = @transform_6, window_bounds = array<i64: 64, 2>}, {pipeline_mode = #tpu.pipeline_mode<synchronous>, transform_indices = @transform_7, window_bounds = array<i64: 1, 2>}, {pipeline_mode = #tpu.pipeline_mode<synchronous>, transform_indices = @transform_8, window_bounds = array<i64: 1, 2>}, {transform_indices = @transform_9, window_bounds = array<i64: 8, 2>}]} {
    %c0 = arith.constant 0 : index
    %c0_0 = arith.constant 0 : index
    %0 = vector.load %arg1[%c0, %c0_0] : memref<8x11xf32, #tpu.memory_space<vmem>>, vector<8x11xf32>
    %c0_1 = arith.constant 0 : index
    %c0_2 = arith.constant 0 : index
    %1 = vector.load %arg3[%c0_1, %c0_2] : memref<11x64xf32, #tpu.memory_space<vmem>>, vector<11x64xf32>
    %cst = arith.constant dense<0.000000e+00> : vector<8x64xf32>
    %2 = tpu.matmul %0, %1, %cst {dimension_numbers = #tpu.dot_dimension_numbers<[1], [0], [0], [1], [0, 0, 1, 1], [], []>} : vector<8x11xf32>, vector<11x64xf32>, vector<8x64xf32> -> vector<8x64xf32>
    %c0_3 = arith.constant 0 : index
    %c0_4 = arith.constant 0 : index
    %3 = vector.load %arg4[%c0_3, %c0_4] : memref<1x64xf32, #tpu.memory_space<vmem>>, vector<1x64xf32>
    %4 = vector.broadcast %3 : vector<1x64xf32> to vector<8x64xf32>
    %5 = arith.addf %2, %4 : vector<8x64xf32>
    %6 = math.tanh %5 : vector<8x64xf32>
    %c0_5 = arith.constant 0 : index
    %c0_6 = arith.constant 0 : index
    %7 = vector.load %arg5[%c0_5, %c0_6] : memref<64x64xf32, #tpu.memory_space<vmem>>, vector<64x64xf32>
    %cst_7 = arith.constant dense<0.000000e+00> : vector<8x64xf32>
    %8 = tpu.matmul %6, %7, %cst_7 {dimension_numbers = #tpu.dot_dimension_numbers<[1], [0], [0], [1], [0, 0, 1, 1], [], []>} : vector<8x64xf32>, vector<64x64xf32>, vector<8x64xf32> -> vector<8x64xf32>
    %c0_8 = arith.constant 0 : index
    %c0_9 = arith.constant 0 : index
    %9 = vector.load %arg6[%c0_8, %c0_9] : memref<1x64xf32, #tpu.memory_space<vmem>>, vector<1x64xf32>
    %10 = vector.broadcast %9 : vector<1x64xf32> to vector<8x64xf32>
    %11 = arith.addf %8, %10 : vector<8x64xf32>
    %12 = math.tanh %11 : vector<8x64xf32>
    %c0_10 = arith.constant 0 : index
    %c0_11 = arith.constant 0 : index
    %13 = vector.load %arg7[%c0_10, %c0_11] : memref<64x2xf32, #tpu.memory_space<vmem>>, vector<64x2xf32>
    %cst_12 = arith.constant dense<0.000000e+00> : vector<8x2xf32>
    %14 = tpu.matmul %12, %13, %cst_12 {dimension_numbers = #tpu.dot_dimension_numbers<[1], [0], [0], [1], [0, 0, 1, 1], [], []>} : vector<8x64xf32>, vector<64x2xf32>, vector<8x2xf32> -> vector<8x2xf32>
    %c0_13 = arith.constant 0 : index
    %c0_14 = arith.constant 0 : index
    %15 = vector.load %arg8[%c0_13, %c0_14] : memref<1x2xf32, #tpu.memory_space<vmem>>, vector<1x2xf32>
    %16 = vector.broadcast %15 : vector<1x2xf32> to vector<8x2xf32>
    %17 = arith.addf %14, %16 : vector<8x2xf32>
    %c0_15 = arith.constant 0 : index
    %c0_16 = arith.constant 0 : index
    %18 = vector.load %arg9[%c0_15, %c0_16] : memref<1x2xf32, #tpu.memory_space<vmem>>, vector<1x2xf32>
    %c0_17 = arith.constant 0 : index
    %c0_18 = arith.constant 0 : index
    %19 = vector.load %arg2[%c0_17, %c0_18] : memref<8x2xf32, #tpu.memory_space<vmem>>, vector<8x2xf32>
    %20 = vector.broadcast %18 : vector<1x2xf32> to vector<8x2xf32>
    %21 = arith.mulf %20, %19 : vector<8x2xf32>
    %22 = arith.addf %17, %21 : vector<8x2xf32>
    %c0_19 = arith.constant 0 : index
    %c0_20 = arith.constant 0 : index
    %23 = vector.load %arg10[%c0_19, %c0_20] : memref<8x2xf32, #tpu.memory_space<vmem>>, vector<8x2xf32>
    tpu.vector_store %arg10[%c0_19, %c0_20], %22 {strides = array<i32>} : memref<8x2xf32, #tpu.memory_space<vmem>>, vector<8x2xf32>,
    return
  }
  func.func @transform_0(%arg0: i32) -> (i32, i32) {
    %c0_i32 = arith.constant 0 : i32
    %c0_i32_0 = arith.constant 0 : i32
    return %arg0, %c0_i32 : i32, i32
  }
  func.func @transform_1(%arg0: i32) -> (i32, i32) {
    %c0_i32 = arith.constant 0 : i32
    %c0_i32_0 = arith.constant 0 : i32
    return %arg0, %c0_i32 : i32, i32
  }
  func.func @transform_2(%arg0: i32) -> (i32, i32) {
    %c0_i32 = arith.constant 0 : i32
    %c0_i32_0 = arith.constant 0 : i32
    %c0_i32_1 = arith.constant 0 : i32
    return %c0_i32, %c0_i32_0 : i32, i32
  }
  func.func @transform_3(%arg0: i32) -> (i32, i32) {
    %c0_i32 = arith.constant 0 : i32
    %c0_i32_0 = arith.constant 0 : i32
    %c0_i32_1 = arith.constant 0 : i32
    return %c0_i32, %c0_i32_0 : i32, i32
  }
  func.func @transform_4(%arg0: i32) -> (i32, i32) {
    %c0_i32 = arith.constant 0 : i32
    %c0_i32_0 = arith.constant 0 : i32
    %c0_i32_1 = arith.constant 0 : i32
    return %c0_i32, %c0_i32_0 : i32, i32
  }
  func.func @transform_5(%arg0: i32) -> (i32, i32) {
    %c0_i32 = arith.constant 0 : i32
    %c0_i32_0 = arith.constant 0 : i32
    %c0_i32_1 = arith.constant 0 : i32
    return %c0_i32, %c0_i32_0 : i32, i32
  }
  func.func @transform_6(%arg0: i32) -> (i32, i32) {
    %c0_i32 = arith.constant 0 : i32
    %c0_i32_0 = arith.constant 0 : i32
    %c0_i32_1 = arith.constant 0 : i32
    return %c0_i32, %c0_i32_0 : i32, i32
  }
  func.func @transform_7(%arg0: i32) -> (i32, i32) {
    %c0_i32 = arith.constant 0 : i32
    %c0_i32_0 = arith.constant 0 : i32
    %c0_i32_1 = arith.constant 0 : i32
    return %c0_i32, %c0_i32_0 : i32, i32
  }
  func.func @transform_8(%arg0: i32) -> (i32, i32) {
    %c0_i32 = arith.constant 0 : i32
    %c0_i32_0 = arith.constant 0 : i32
    %c0_i32_1 = arith.constant 0 : i32
    return %c0_i32, %c0_i32_0 : i32, i32
  }
  func.func @transform_9(%arg0: i32) -> (i32, i32) {
    %c0_i32 = arith.constant 0 : i32
    %c0_i32_0 = arith.constant 0 : i32
    return %arg0, %c0_i32 : i32, i32
  }
}

</mosaic_0001>

<llo_original>
// kernel: tpu_custom_call.1
$region0: #{tpu_custom_call.1}
  #allocation0 [shape = 'u32[]', space=smem, size = 0x4, offset = 0x4, fixed_abs, tag = 'smem constant byte address 0x4 - core index']
  #allocation1 [shape = 'u32[144,128]{1,0:T(1,128)}', space=vmem, size = 0x12000, scoped, tag = 'internal scratch']
  %s0 = inlined_call_operand.vmem [shape: f32[8,11], index: 0, kind: input, shape index: {}]
  %s1 = inlined_call_operand.vmem [shape: f32[8,2], index: 1, kind: input, shape index: {}]
  %s2 = inlined_call_operand.vmem [shape: f32[11,64], index: 2, kind: input, shape index: {}]
  %s3 = inlined_call_operand.vmem [shape: f32[1,64], index: 3, kind: input, shape index: {}]
  %s4 = inlined_call_operand.vmem [shape: f32[64,64], index: 4, kind: input, shape index: {}]
  %s5 = inlined_call_operand.vmem [shape: f32[1,64], index: 5, kind: input, shape index: {}]
  %s6 = inlined_call_operand.vmem [shape: f32[64,2], index: 6, kind: input, shape index: {}]
  %s7 = inlined_call_operand.vmem [shape: f32[1,2], index: 7, kind: input, shape index: {}]
  %s8 = inlined_call_operand.vmem [shape: f32[1,2], index: 8, kind: input, shape index: {}]
  %s9 = inlined_call_operand.vmem [shape: f32[8,2], index: 9, kind: output, shape index: {}]
  %s10 = sld [smem:[#allocation0]]
  $region46: #{tpu_custom_call.1} parent=0
    _
  %s12 = ssub.s32 1, %s10
  %s13 = scalar_select 0, %s12, %s10
  // Predicated region
  $region2: #{tpu_custom_call.1} parent=0 // pred_check
    _
  $region3: #{tpu_custom_call.1} parent=0 // pred_check_branch
    %15 = sbr.rel (0) target = $region5
  $region4: #{tpu_custom_call.1} parent=0 // pred_region
    _
  $region5: #{tpu_custom_call.1} parent=0 // pred_fallthru
    _
  // Predicated region
  $region6: #{tpu_custom_call.1} parent=0 // pred_check
    _
  $region7: #{tpu_custom_call.1} parent=0 // pred_check_branch
    %17 = sbr.rel (0) target = $region9
  $region8: #{tpu_custom_call.1} parent=0 // pred_region
    _
  $region9: #{tpu_custom_call.1} parent=0 // pred_fallthru
    _
  // Predicated region
  $region10: #{tpu_custom_call.1} parent=0 // pred_check
    _
  $region11: #{tpu_custom_call.1} parent=0 // pred_check_branch
    %19 = sbr.rel (0) target = $region13
  $region12: #{tpu_custom_call.1} parent=0 // pred_region
    _
  $region13: #{tpu_custom_call.1} parent=0 // pred_fallthru
    _
  // Predicated region
  $region14: #{tpu_custom_call.1} parent=0 // pred_check
    _
  $region15: #{tpu_custom_call.1} parent=0 // pred_check_branch
    %21 = sbr.rel (0) target = $region17
  $region16: #{tpu_custom_call.1} parent=0 // pred_region
    _
  $region17: #{tpu_custom_call.1} parent=0 // pred_fallthru
    _
  // Predicated region
  $region18: #{tpu_custom_call.1} parent=0 // pred_check
    _
  $region19: #{tpu_custom_call.1} parent=0 // pred_check_branch
    %23 = sbr.rel (0) target = $region21
  $region20: #{tpu_custom_call.1} parent=0 // pred_region
    _
  $region21: #{tpu_custom_call.1} parent=0 // pred_fallthru
    _
  // Predicated region
  $region22: #{tpu_custom_call.1} parent=0 // pred_check
    _
  $region23: #{tpu_custom_call.1} parent=0 // pred_check_branch
    %25 = sbr.rel (0) target = $region25
  $region24: #{tpu_custom_call.1} parent=0 // pred_region
    _
  $region25: #{tpu_custom_call.1} parent=0 // pred_fallthru
    _
  // Predicated region
  $region26: #{tpu_custom_call.1} parent=0 // pred_check
    _
  $region27: #{tpu_custom_call.1} parent=0 // pred_check_branch
    %27 = sbr.rel (0) target = $region29
  $region28: #{tpu_custom_call.1} parent=0 // pred_region
    _
  $region29: #{tpu_custom_call.1} parent=0 // pred_fallthru
    _
  // Predicated region
  $region30: #{tpu_custom_call.1} parent=0 // pred_check
    _
  $region31: #{tpu_custom_call.1} parent=0 // pred_check_branch
    %29 = sbr.rel (0) target = $region33
  $region32: #{tpu_custom_call.1} parent=0 // pred_region
    _
  $region33: #{tpu_custom_call.1} parent=0 // pred_fallthru
    _
  // Predicated region
  $region34: #{tpu_custom_call.1} parent=0 // pred_check
    _
  $region35: #{tpu_custom_call.1} parent=0 // pred_check_branch
    %31 = sbr.rel (0) target = $region37
  $region36: #{tpu_custom_call.1} parent=0 // pred_region
    _
  $region37: #{tpu_custom_call.1} parent=0 // pred_fallthru
    _
  %v32 = vld [vmem:[%s0] sm:$0xff]
  %v33 = vld [vmem:[%s2] sm:$0xff]
  %v34 = vld [vmem:[%s2 + $0x8] sm:$0x7]
  %v35 = vld [vmem:[%s3] sm:$0x1]
  %v37 = vlaneseq
  %v38 = vshrl.u32 %v37, 7
  %v39 = vsub.s32 0, %v38
  %v40 = vrot.slane %v35, %v39
  %vm42 = vcmask 89088
  %v44 = vsel %vm42, %v32, 0
  %vm46 = vcmask 1042432
  %v48 = vsel %vm46, %v34, 0
  %50 = vmatprep.subr.mxu0 0.0
  %51 = vmatpush1.msra.mxu0 %v33
  %52 = vmatprep.subr.mxu0 0.0
  %53 = vmatpush1.msra.mxu0 %v48
  %54 = vmatprep.subr.mxu0 0.0
  %55 = vmatpush1.msra.mxu0 0.0
  %56 = vmatprep.subr.mxu0 0.0
  %57 = vmatpush1.msra.mxu0 0.0
  %58 = vmatprep.subr.mxu0 0.0
  %59 = vmatpush1.msra.mxu0 0.0
  %60 = vmatprep.subr.mxu0 0.0
  %61 = vmatpush1.msra.mxu0 0.0
  %62 = vmatprep.subr.mxu0 0.0
  %63 = vmatpush1.msra.mxu0 0.0
  %64 = vmatprep.subr.mxu0 0.0
  %65 = vmatpush1.msra.mxu0 0.0
  %66 = vmatprep.subr.mxu0 0.0
  %67 = vmatpush1.msra.mxu0 0.0
  %68 = vmatprep.subr.mxu0 0.0
  %69 = vmatpush1.msra.mxu0 0.0
  %70 = vmatprep.subr.mxu0 0.0
  %71 = vmatpush1.msra.mxu0 0.0
  %72 = vmatprep.subr.mxu0 0.0
  %73 = vmatpush1.msra.mxu0 0.0
  %74 = vmatprep.subr.mxu0 0.0
  %75 = vmatpush1.msra.mxu0 0.0
  %76 = vmatprep.subr.mxu0 0.0
  %77 = vmatpush1.msra.mxu0 0.0
  %78 = vmatprep.subr.mxu0 0.0
  %79 = vmatpush1.msra.mxu0 0.0
  %80 = vmatprep.subr.mxu0 0.0
  %81 = vmatpush1.msra.mxu0 0.0
  %82 = vmatprep.subr.mxu0 0.0
  %83 = vmatpush1.msra.mxu0 0.0
  %84 = vmatprep.subr.mxu0 0.0
  %85 = vmatpush1.msra.mxu0 0.0
  %86 = vmatprep.subr.mxu0 0.0
  %87 = vmatpush1.msra.mxu0 0.0
  %88 = vmatprep.subr.mxu0 0.0
  %89 = vmatpush1.msra.mxu0 0.0
  %90 = vmatprep.subr.mxu0 0.0
  %91 = vmatpush1.msra.mxu0 0.0
  %92 = vmatprep.subr.mxu0 0.0
  %93 = vmatpush1.msra.mxu0 0.0
  %94 = vmatprep.subr.mxu0 0.0
  %95 = vmatpush1.msra.mxu0 0.0
  %96 = vmatprep.subr.mxu0 0.0
  %97 = vmatpush1.msra.mxu0 0.0
  %98 = vmatprep.subr.mxu0 0.0
  %99 = vmatpush1.msra.mxu0 0.0
  %100 = vmatprep.subr.mxu0 0.0
  %101 = vmatpush1.msra.mxu0 0.0
  %102 = vmatprep.subr.mxu0 0.0
  %103 = vmatpush1.msra.mxu0 0.0
  %104 = vmatprep.subr.mxu0 0.0
  %105 = vmatpush1.msra.mxu0 0.0
  %106 = vmatprep.subr.mxu0 0.0
  %107 = vmatpush1.msra.mxu0 0.0
  %108 = vmatprep.subr.mxu0 0.0
  %109 = vmatpush1.msra.mxu0 0.0
  %110 = vmatprep.subr.mxu0 0.0
  %111 = vmatpush1.msra.mxu0 0.0
  %112 = vmatprep.subr.mxu0 0.0
  %113 = vmatpush1.msra.mxu0 0.0
  %114 = vmatprep.mubr.f32.mxu0 0.0
  %115 = vmatmul.mubr.f32.gmra.mrb[0].mxu0 %v44
  %v116 = vpop.f32.mrb[0].mxu0
  %v117 = vadd.f32 %v40, %v116
  %v118 = vpop.f32.mrb[0].mxu0
  %119 = vdwg.mxu0
  %v120 = vtanh.pop %v117
  %v121 = vld [vmem:[%s4] sm:$0xff]
  %v122 = vld [vmem:[%s4 + $0x8] sm:$0xff]
  %v123 = vld [vmem:[%s4 + $0x10] sm:$0xff]
  %v124 = vld [vmem:[%s4 + $0x18] sm:$0xff]
  %v125 = vld [vmem:[%s4 + $0x20] sm:$0xff]
  %v126 = vld [vmem:[%s4 + $0x28] sm:$0xff]
  %v127 = vld [vmem:[%s4 + $0x30] sm:$0xff]
  %v128 = vld [vmem:[%s4 + $0x38] sm:$0xff]
  %v129 = vld [vmem:[%s5] sm:$0x1]
  %v131 = vlaneseq
  %v132 = vshrl.u32 %v131, 7
  %v133 = vsub.s32 0, %v132
  %v134 = vrot.slane %v129, %v133
  %vm136 = vcmask 523264
  %v138 = vsel %vm136, %v120, 0
  %140 = vmatprep.subr.mxu0 0.0
  %141 = vmatpush1.msra.mxu0 %v121
  %142 = vmatprep.subr.mxu0 0.0
  %143 = vmatpush1.msra.mxu0 %v122
  %144 = vmatprep.subr.mxu0 0.0
  %145 = vmatpush1.msra.mxu0 %v123
  %146 = vmatprep.subr.mxu0 0.0
  %147 = vmatpush1.msra.mxu0 %v124
  %148 = vmatprep.subr.mxu0 0.0
  %149 = vmatpush1.msra.mxu0 %v125
  %150 = vmatprep.subr.mxu0 0.0
  %151 = vmatpush1.msra.mxu0 %v126
  %152 = vmatprep.subr.mxu0 0.0
  %153 = vmatpush1.msra.mxu0 %v127
  %154 = vmatprep.subr.mxu0 0.0
  %155 = vmatpush1.msra.mxu0 %v128
  %156 = vmatprep.subr.mxu0 0.0
  %157 = vmatpush1.msra.mxu0 0.0
  %158 = vmatprep.subr.mxu0 0.0
  %159 = vmatpush1.msra.mxu0 0.0
  %160 = vmatprep.subr.mxu0 0.0
  %161 = vmatpush1.msra.mxu0 0.0
  %162 = vmatprep.subr.mxu0 0.0
  %163 = vmatpush1.msra.mxu0 0.0
  %164 = vmatprep.subr.mxu0 0.0
  %165 = vmatpush1.msra.mxu0 0.0
  %166 = vmatprep.subr.mxu0 0.0
  %167 = vmatpush1.msra.mxu0 0.0
  %168 = vmatprep.subr.mxu0 0.0
  %169 = vmatpush1.msra.mxu0 0.0
  %170 = vmatprep.subr.mxu0 0.0
  %171 = vmatpush1.msra.mxu0 0.0
  %172 = vmatprep.subr.mxu0 0.0
  %173 = vmatpush1.msra.mxu0 0.0
  %174 = vmatprep.subr.mxu0 0.0
  %175 = vmatpush1.msra.mxu0 0.0
  %176 = vmatprep.subr.mxu0 0.0
  %177 = vmatpush1.msra.mxu0 0.0
  %178 = vmatprep.subr.mxu0 0.0
  %179 = vmatpush1.msra.mxu0 0.0
  %180 = vmatprep.subr.mxu0 0.0
  %181 = vmatpush1.msra.mxu0 0.0
  %182 = vmatprep.subr.mxu0 0.0
  %183 = vmatpush1.msra.mxu0 0.0
  %184 = vmatprep.subr.mxu0 0.0
  %185 = vmatpush1.msra.mxu0 0.0
  %186 = vmatprep.subr.mxu0 0.0
  %187 = vmatpush1.msra.mxu0 0.0
  %188 = vmatprep.subr.mxu0 0.0
  %189 = vmatpush1.msra.mxu0 0.0
  %190 = vmatprep.subr.mxu0 0.0
  %191 = vmatpush1.msra.mxu0 0.0
  %192 = vmatprep.subr.mxu0 0.0
  %193 = vmatpush1.msra.mxu0 0.0
  %194 = vmatprep.subr.mxu0 0.0
  %195 = vmatpush1.msra.mxu0 0.0
  %196 = vmatprep.subr.mxu0 0.0
  %197 = vmatpush1.msra.mxu0 0.0
  %198 = vmatprep.subr.mxu0 0.0
  %199 = vmatpush1.msra.mxu0 0.0
  %200 = vmatprep.subr.mxu0 0.0
  %201 = vmatpush1.msra.mxu0 0.0
  %202 = vmatprep.subr.mxu0 0.0
  %203 = vmatpush1.msra.mxu0 0.0
  %204 = vmatprep.mubr.f32.mxu0 0.0
  %205 = vmatmul.mubr.f32.gmra.mrb[0].mxu0 %v138
  %v206 = vpop.f32.mrb[0].mxu0
  %v207 = vadd.f32 %v134, %v206
  %v208 = vpop.f32.mrb[0].mxu0
  %209 = vdwg.mxu0
  %v210 = vtanh.pop %v207
  %v211 = vld [vmem:[%s6] sm:$0xff]
  %v212 = vld [vmem:[%s6 + $0x8] sm:$0xff]
  %v213 = vld [vmem:[%s6 + $0x10] sm:$0xff]
  %v214 = vld [vmem:[%s6 + $0x18] sm:$0xff]
  %v215 = vld [vmem:[%s6 + $0x20] sm:$0xff]
  %v216 = vld [vmem:[%s6 + $0x28] sm:$0xff]
  %v217 = vld [vmem:[%s6 + $0x30] sm:$0xff]
  %v218 = vld [vmem:[%s6 + $0x38] sm:$0xff]
  %v219 = vld [vmem:[%s7] sm:$0x1]
  %v221 = vlaneseq
  %v222 = vshrl.u32 %v221, 7
  %v223 = vsub.s32 0, %v222
  %v224 = vrot.slane %v219, %v223
  %v227 = vsel %vm136, %v210, 0
  %229 = vmatprep.subr.mxu0 0.0
  %230 = vmatpush1.msra.mxu0 %v211
  %231 = vmatprep.subr.mxu0 0.0
  %232 = vmatpush1.msra.mxu0 %v212
  %233 = vmatprep.subr.mxu0 0.0
  %234 = vmatpush1.msra.mxu0 %v213
  %235 = vmatprep.subr.mxu0 0.0
  %236 = vmatpush1.msra.mxu0 %v214
  %237 = vmatprep.subr.mxu0 0.0
  %238 = vmatpush1.msra.mxu0 %v215
  %239 = vmatprep.subr.mxu0 0.0
  %240 = vmatpush1.msra.mxu0 %v216
  %241 = vmatprep.subr.mxu0 0.0
  %242 = vmatpush1.msra.mxu0 %v217
  %243 = vmatprep.subr.mxu0 0.0
  %244 = vmatpush1.msra.mxu0 %v218
  %245 = vmatprep.subr.mxu0 0.0
  %246 = vmatpush1.msra.mxu0 0.0
  %247 = vmatprep.subr.mxu0 0.0
  %248 = vmatpush1.msra.mxu0 0.0
  %249 = vmatprep.subr.mxu0 0.0
  %250 = vmatpush1.msra.mxu0 0.0
  %251 = vmatprep.subr.mxu0 0.0
  %252 = vmatpush1.msra.mxu0 0.0
  %253 = vmatprep.subr.mxu0 0.0
  %254 = vmatpush1.msra.mxu0 0.0
  %255 = vmatprep.subr.mxu0 0.0
  %256 = vmatpush1.msra.mxu0 0.0
  %257 = vmatprep.subr.mxu0 0.0
  %258 = vmatpush1.msra.mxu0 0.0
  %259 = vmatprep.subr.mxu0 0.0
  %260 = vmatpush1.msra.mxu0 0.0
  %261 = vmatprep.subr.mxu0 0.0
  %262 = vmatpush1.msra.mxu0 0.0
  %263 = vmatprep.subr.mxu0 0.0
  %264 = vmatpush1.msra.mxu0 0.0
  %265 = vmatprep.subr.mxu0 0.0
  %266 = vmatpush1.msra.mxu0 0.0
  %267 = vmatprep.subr.mxu0 0.0
  %268 = vmatpush1.msra.mxu0 0.0
  %269 = vmatprep.subr.mxu0 0.0
  %270 = vmatpush1.msra.mxu0 0.0
  %271 = vmatprep.subr.mxu0 0.0
  %272 = vmatpush1.msra.mxu0 0.0
  %273 = vmatprep.subr.mxu0 0.0
  %274 = vmatpush1.msra.mxu0 0.0
  %275 = vmatprep.subr.mxu0 0.0
  %276 = vmatpush1.msra.mxu0 0.0
  %277 = vmatprep.subr.mxu0 0.0
  %278 = vmatpush1.msra.mxu0 0.0
  %279 = vmatprep.subr.mxu0 0.0
  %280 = vmatpush1.msra.mxu0 0.0
  %281 = vmatprep.subr.mxu0 0.0
  %282 = vmatpush1.msra.mxu0 0.0
  %283 = vmatprep.subr.mxu0 0.0
  %284 = vmatpush1.msra.mxu0 0.0
  %285 = vmatprep.subr.mxu0 0.0
  %286 = vmatpush1.msra.mxu0 0.0
  %287 = vmatprep.subr.mxu0 0.0
  %288 = vmatpush1.msra.mxu0 0.0
  %289 = vmatprep.subr.mxu0 0.0
  %290 = vmatpush1.msra.mxu0 0.0
  %291 = vmatprep.subr.mxu0 0.0
  %292 = vmatpush1.msra.mxu0 0.0
  %293 = vmatprep.mubr.f32.mxu0 0.0
  %294 = vmatmul.mubr.f32.gmra.mrb[0].mxu0 %v227
  %v295 = vpop.f32.mrb[0].mxu0
  %v296 = vadd.f32 %v224, %v295
  %v297 = vpop.f32.mrb[0].mxu0
  %298 = vdwg.mxu0
  %v299 = vld [vmem:[%s8] sm:$0x1]
  %v300 = vld [vmem:[%s1] sm:$0xff]
  %v302 = vlaneseq
  %v303 = vshrl.u32 %v302, 7
  %v304 = vsub.s32 0, %v303
  %v305 = vrot.slane %v299, %v304
  %v307 = vmul.f32 %v305, %v300
  %v308 = vadd.f32 %v296, %v307
  %vm309 = vcmask 15360
  %310 = vst.msk [vmem:[%s9] sm:$0xff] %vm309, %v308
  // Predicated region
  $region38: #{tpu_custom_call.1} parent=0 // pred_check
    _
  $region39: #{tpu_custom_call.1} parent=0 // pred_check_branch
    %312 = sbr.rel (0) target = $region41
  $region40: #{tpu_custom_call.1} parent=0 // pred_region
    _
  $region41: #{tpu_custom_call.1} parent=0 // pred_fallthru
    _
  // Predicated region
  $region42: #{tpu_custom_call.1} parent=0 // pred_check
    _
  $region43: #{tpu_custom_call.1} parent=0 // pred_check_branch
    %314 = sbr.rel (0) target = $region45
  $region44: #{tpu_custom_call.1} parent=0 // pred_region
    _
  $region45: #{tpu_custom_call.1} parent=0 // pred_fallthru
    _

</llo_original>
